<compile_context>
chip_gen: v5e
topology: v5e:2x2
jax: 0.10.0
libtpu: 0.0.40
codegen_flags: <defaults>
</compile_context>

<pallas_src>
import functools

import jax
import jax.numpy as jnp
from jax.experimental import pallas as pl
from jax.experimental.pallas import tpu as pltpu


_VMEM_LIMIT_BYTES = 48 * 1024 * 1024       # safe on v7x (64 MiB physical VMEM)
_DEFAULT_VMEM_BUDGET = 40 * 1024 * 1024    # tile-planning budget (< limit, headroom)
_SMALL_FASTPATH_ELEMS = 1 << 16            # B*H*F below this -> plain XLA matmul


def _round_up(x, m):
    return ((x + m - 1) // m) * m


def _pick_tile(n, candidates, align):
    """Largest tile from `candidates` whose padding waste stays within ~25%
    of the minimum achievable (align-granular) padding."""
    min_pad = _round_up(n, align)
    cap = max(int(min_pad * 1.25), align)
    for t in candidates:
        p = _round_up(n, t)
        if p <= cap:
            return t, p
    return align, min_pad


def _vmem_estimate(tm, tn, tk, in_bytes, out_bytes, needs_scratch):
    x_t = 2 * tm * tk * in_bytes            # double-buffered x tile
    w_t = 2 * tk * tn * in_bytes            # double-buffered w tile
    b_t = 2 * tn * 4                        # bias tile (f32)
    o_t = 2 * tm * tn * out_bytes           # output tile
    s_t = tm * tn * 4 if needs_scratch else 0
    return x_t + w_t + b_t + o_t + s_t


def _pick_tk(pH, tm, tn, in_bytes, out_bytes, out_is_f32, budget):
    """Prefer collapsing K entirely; otherwise largest K tile fitting budget."""
    if _vmem_estimate(tm, tn, pH, in_bytes, out_bytes, False) <= budget:
        return pH
    for c in (2048, 1024, 512, 256, 128):
        if pH % c == 0 and _vmem_estimate(
                tm, tn, c, in_bytes, out_bytes, not out_is_f32) <= budget:
            return c
    return 128


# --------------------------------------------------------------------------
# Kernels
# --------------------------------------------------------------------------

def _linear_single_k_kernel(x_ref, w_ref, b_ref, o_ref):
    # Whole hidden dim resident: one MXU matmul + bias, no accumulator.
    acc = jnp.dot(x_ref[...], w_ref[...], preferred_element_type=jnp.float32)
    o_ref[...] = (acc + b_ref[...]).astype(o_ref.dtype)


def _linear_multi_k_f32out_kernel(x_ref, w_ref, b_ref, o_ref):
    # f32 output: accumulate directly into the resident output block.
    # NOTE: relies on K being the LAST grid axis ("arbitrary").
    k = pl.program_id(2)

    @pl.when(k == 0)
    def _init():
        o_ref[...] = jnp.broadcast_to(b_ref[...], o_ref.shape).astype(o_ref.dtype)

    o_ref[...] += jnp.dot(x_ref[...], w_ref[...],
                          preferred_element_type=jnp.float32)


def _linear_multi_k_scratch_kernel(x_ref, w_ref, b_ref, o_ref, acc_ref):
    # Non-f32 output: keep an f32 VMEM accumulator, finalize once.
    k = pl.program_id(2)

    @pl.when(k == 0)
    def _init():
        acc_ref[...] = jnp.zeros_like(acc_ref)

    acc_ref[...] += jnp.dot(x_ref[...], w_ref[...],
                            preferred_element_type=jnp.float32)

    @pl.when(k == pl.num_programs(2) - 1)
    def _finalize():
        o_ref[...] = (acc_ref[...] + b_ref[...]).astype(o_ref.dtype)


# --------------------------------------------------------------------------
# Wrapper
# --------------------------------------------------------------------------

@functools.partial(jax.jit, static_argnames=("out_features", "tn", "vmem_budget"))
def _receiver_apply(x, w_packed, b_packed, *, out_features, tn, vmem_budget):
    B, H = x.shape
    pH, pF = w_packed.shape
    compute_dtype = w_packed.dtype
    out_dtype = x.dtype
    out_is_f32 = jnp.dtype(out_dtype) == jnp.dtype(jnp.float32)
    in_bytes = jnp.dtype(compute_dtype).itemsize
    out_bytes = jnp.dtype(out_dtype).itemsize

    # Batch tile: dtype-aware sublane padding (16 covers bf16 and f32).
    tm, pB = _pick_tile(B, (512, 256, 128, 64, 32, 16), 16)

    # v7x: make sure the parallel (M,N) grid has >= 2 blocks so both TCs work.
    if (pB // tm) * (pF // tn) == 1:
        if tn >= 256:
            tn //= 2
        elif tm >= 32:
            tm //= 2

    tk = _pick_tk(pH, tm, tn, in_bytes, out_bytes, out_is_f32, vmem_budget)

    # Cast first (half the padding traffic), then zero-pad to tiled shape.
    x_p = jnp.pad(x.astype(compute_dtype), ((0, pB - B), (0, pH - H)))

    grid_m, grid_n = pB // tm, pF // tn

    if tk == pH:
        out_p = pl.pallas_call(
            _linear_single_k_kernel,
            out_shape=jax.ShapeDtypeStruct((pB, pF), out_dtype),
            grid=(grid_m, grid_n),
            in_specs=[
                pl.BlockSpec((tm, pH), lambda i, j: (i, 0)),   # x tile (full K)
                pl.BlockSpec((pH, tn), lambda i, j: (0, j)),   # w tile (full K)
                pl.BlockSpec((1, tn), lambda i, j: (0, j)),    # bias
            ],
            out_specs=pl.BlockSpec((tm, tn), lambda i, j: (i, j)),
            compiler_params=pltpu.CompilerParams(
                dimension_semantics=("parallel", "parallel"),
                vmem_limit_bytes=_VMEM_LIMIT_BYTES,
            ),
        )(x_p, w_packed, b_packed)
    else:
        grid = (grid_m, grid_n, pH // tk)
        common = dict(
            out_shape=jax.ShapeDtypeStruct((pB, pF), out_dtype),
            grid=grid,
            in_specs=[
                pl.BlockSpec((tm, tk), lambda i, j, k: (i, k)),   # x tile
                pl.BlockSpec((tk, tn), lambda i, j, k: (k, j)),   # w tile
                pl.BlockSpec((1, tn), lambda i, j, k: (0, j)),    # bias (resident)
            ],
            out_specs=pl.BlockSpec((tm, tn), lambda i, j, k: (i, j)),
            compiler_params=pltpu.CompilerParams(
                dimension_semantics=("parallel", "parallel", "arbitrary"),
                vmem_limit_bytes=_VMEM_LIMIT_BYTES,
            ),
        )
        if out_is_f32:
            out_p = pl.pallas_call(
                _linear_multi_k_f32out_kernel, **common
            )(x_p, w_packed, b_packed)
        else:
            out_p = pl.pallas_call(
                _linear_multi_k_scratch_kernel,
                scratch_shapes=[pltpu.VMEM((tm, tn), jnp.float32)],
                **common,
            )(x_p, w_packed, b_packed)

    return out_p[:B, :out_features]


class ReceiverPallas:
    """Pallas equivalent of Receiver: y = x @ W^T + b.

    The weight is packed once at construction (transpose + lane-dense pad +
    bf16 cast) so the per-call path streams it exactly once.
    """

    def __init__(self, weight, bias, compute_dtype=jnp.bfloat16,
                 vmem_budget=_DEFAULT_VMEM_BUDGET):
        F, H = weight.shape
        assert bias.shape == (F,)
        self.n_features = int(F)
        self.n_hidden = int(H)
        self.vmem_budget = int(vmem_budget)

        # Keep originals (f32) for the tiny-shape XLA fast path.
        self.weight = weight
        self.bias = bias

        # One-time packing: (H, F) layout, padded lane-dense, compute dtype.
        self.tn, pF = _pick_tile(F, (512, 256, 128), 128)
        pH = _round_up(H, 128)
        w_t = weight.T.astype(compute_dtype)                       # (H, F)
        self.w_packed = jnp.pad(w_t, ((0, pH - H), (0, pF - F)))   # (pH, pF)
        b2d = bias.astype(jnp.float32).reshape(1, F)
        self.b_packed = jnp.pad(b2d, ((0, 0), (0, pF - F)))        # (1, pF)

    def __call__(self, x, _input=None, _aux_input=None):
        B, H = x.shape
        assert H == self.n_hidden
        if B * H * self.n_features <= _SMALL_FASTPATH_ELEMS:
            # Tiny shapes: pad/launch/slice overhead dominates; fused XLA wins.
            return (jnp.dot(x, self.weight.T) + self.bias).astype(x.dtype)
        return _receiver_apply(
            x, self.w_packed, self.b_packed,
            out_features=self.n_features, tn=self.tn,
            vmem_budget=self.vmem_budget)


# --------------------------------------------------------------------------
# Demo / correctness check
# --------------------------------------------------------------------------

if __name__ == "__main__":
    key = jax.random.PRNGKey(0)

    def make_case(key, batch, n_hidden, n_features):
        kx, kw, kb = jax.random.split(key, 3)
        x = jax.random.normal(kx, (batch, n_hidden), dtype=jnp.float32)
        w = jax.random.normal(kw, (n_features, n_hidden), dtype=jnp.float32) * 0.1
        b = jax.random.normal(kb, (n_features,), dtype=jnp.float32) * 0.1
        return x, w, b

    k1, k2, k3 = jax.random.split(key, 3)

    # Case 1: tiny Receiver shapes -> XLA fast path (exact).
    x, w, b = make_case(k1, batch=8, n_hidden=32, n_features=16)
    mod = ReceiverPallas(w, b)
    out = jax.block_until_ready(mod(x, None, None))
    ref = x @ w.T + b
    assert out.shape == (8, 16)
    assert jnp.allclose(out, ref, atol=1e-5, rtol=1e-5)

    # Case 2: Pallas path, single-K kernel, non-aligned B/F to exercise padding.
    x, w, b = make_case(k2, batch=96, n_hidden=256, n_features=192)
    mod = ReceiverPallas(w, b)
    out = jax.block_until_ready(mod(x, None, None))
    ref_bf16 = jnp.dot(x.astype(jnp.bfloat16), w.T.astype(jnp.bfloat16),
                       preferred_element_type=jnp.float32) + b
    assert out.shape == (96, 192)
    assert jnp.allclose(out, ref_bf16, atol=1e-2, rtol=1e-2)

    # Case 3: force the multi-K path (tiny VMEM budget) to exercise the
    # K-axis accumulation kernel as well.
    x, w, b = make_case(k3, batch=128, n_hidden=512, n_features=256)
    mod = ReceiverPallas(w, b, vmem_budget=512 * 1024)
    out = jax.block_until_ready(mod(x, None, None))
    ref_bf16 = jnp.dot(x.astype(jnp.bfloat16), w.T.astype(jnp.bfloat16),
                       preferred_element_type=jnp.float32) + b
    assert out.shape == (128, 256)
    assert jnp.allclose(out, ref_bf16, atol=2e-2, rtol=2e-2)

    print("KERNEL_OK")
</pallas_src>

<mosaic_0001>
module attributes {stable_mosaic.version = 11 : i64} {
  func.func @_linear_single_k_kernel(%arg0: i32, %arg1: i32, %arg2: memref<32x256xbf16, #tpu.memory_space<vmem>>, %arg3: memref<256x256xbf16, #tpu.memory_space<vmem>>, %arg4: memref<1x256xf32, #tpu.memory_space<vmem>>, %arg5: memref<32x256xf32, #tpu.memory_space<vmem>>) attributes {dimension_semantics = [#tpu.dimension_semantics<parallel>, #tpu.dimension_semantics<parallel>], iteration_bounds = array<i64: 3, 1>, scalar_prefetch = 0 : i64, scratch_operands = 0 : i64, tpu.core_type = #tpu.core_type<tc>, window_params = [{transform_indices = @transform_0, window_bounds = array<i64: 32, 256>}, {transform_indices = @transform_1, window_bounds = array<i64: 256, 256>}, {transform_indices = @transform_2, window_bounds = array<i64: 1, 256>}, {transform_indices = @transform_3, window_bounds = array<i64: 32, 256>}]} {
    %c0 = arith.constant 0 : index
    %c0_0 = arith.constant 0 : index
    %0 = vector.load %arg2[%c0, %c0_0] : memref<32x256xbf16, #tpu.memory_space<vmem>>, vector<32x256xbf16>
    %c0_1 = arith.constant 0 : index
    %c0_2 = arith.constant 0 : index
    %1 = vector.load %arg3[%c0_1, %c0_2] : memref<256x256xbf16, #tpu.memory_space<vmem>>, vector<256x256xbf16>
    %cst = arith.constant dense<0.000000e+00> : vector<32x256xf32>
    %2 = tpu.matmul %0, %1, %cst {dimension_numbers = #tpu.dot_dimension_numbers<[1], [0], [0], [1], [0, 0, 1, 1], [], []>} : vector<32x256xbf16>, vector<256x256xbf16>, vector<32x256xf32> -> vector<32x256xf32>
    %c0_3 = arith.constant 0 : index
    %c0_4 = arith.constant 0 : index
    %3 = vector.load %arg4[%c0_3, %c0_4] : memref<1x256xf32, #tpu.memory_space<vmem>>, vector<1x256xf32>
    %4 = vector.broadcast %3 : vector<1x256xf32> to vector<32x256xf32>
    %5 = arith.addf %2, %4 : vector<32x256xf32>
    %c0_5 = arith.constant 0 : index
    %c0_6 = arith.constant 0 : index
    %6 = vector.load %arg5[%c0_5, %c0_6] : memref<32x256xf32, #tpu.memory_space<vmem>>, vector<32x256xf32>
    tpu.vector_store %arg5[%c0_5, %c0_6], %5 {strides = array<i32>} : memref<32x256xf32, #tpu.memory_space<vmem>>, vector<32x256xf32>,
    return
  }
  func.func @transform_0(%arg0: i32, %arg1: i32) -> (i32, i32) {
    %c0_i32 = arith.constant 0 : i32
    %c0_i32_0 = arith.constant 0 : i32
    return %arg0, %c0_i32 : i32, i32
  }
  func.func @transform_1(%arg0: i32, %arg1: i32) -> (i32, i32) {
    %c0_i32 = arith.constant 0 : i32
    %c0_i32_0 = arith.constant 0 : i32
    return %c0_i32, %arg1 : i32, i32
  }
  func.func @transform_2(%arg0: i32, %arg1: i32) -> (i32, i32) {
    %c0_i32 = arith.constant 0 : i32
    %c0_i32_0 = arith.constant 0 : i32
    return %c0_i32, %arg1 : i32, i32
  }
  func.func @transform_3(%arg0: i32, %arg1: i32) -> (i32, i32) {
    %c0_i32 = arith.constant 0 : i32
    return %arg0, %arg1 : i32, i32
  }
}

</mosaic_0001>

<llo_original>
// kernel: _receiver_apply.1
$region0: #{_receiver_apply.1}
  #allocation0 [shape = 'u32[]', space=smem, size = 0x4, offset = 0x4, fixed_abs, tag = 'smem constant byte address 0x4 - core index']
  #allocation1 [shape = 'u32[72,128]{1,0:T(1,128)}', space=vmem, size = 0x9000, scoped, tag = 'internal scratch']
  %s0 = inlined_call_operand.vmem [shape: bf16[96,256], index: 0, kind: input, shape index: {}]
  %s1 = inlined_call_operand.vmem [shape: bf16[256,256], index: 1, kind: input, shape index: {}]
  %s2 = inlined_call_operand.vmem [shape: f32[1,256], index: 2, kind: input, shape index: {}]
  %s3 = inlined_call_operand.hbm [shape: f32[96,256], index: 3, kind: output, shape index: {}]
  %s4 = sld [smem:[#allocation0]]
  $region45: #{_receiver_apply.1} parent=0
    _
  %s6 = ssub.s32 1, %s4
  %s7 = scalar_select 0, %s6, %s4
  $region1: #{_receiver_apply.1} parent=0
    #allocation2 [shape = 'u8[65536]{0}', space=vmem, size = 0x10000, scoped, tag = 'output window, operand 0']
    #allocation3 [shape = 's32[2]{0}', space=sflag, size = 0x8, scoped, tag = 'scoped memory for _receiver_apply.1']
    %8 = vsyncpa [#allocation3], 0
    %s9 = scalar_lea.sflag [#allocation3], 1
    %10 = vsyncpa %s9, 0
    loop: start=0, step=1, limit=5
    $region2: #{_receiver_apply.1} parent=1 // loop_pre_header
      _
    $region3: #{_receiver_apply.1} parent=1 // loop_header
      %s12 = sphi 0, %s16
      %p13 = scmp.ge.s32.totalorder %s12, 5
      %s19 = sphi 0, %s31
      %s20 = sphi 0, %s27
      %s21 = sphi 0, %s19
      %s22 = sphi 0, %s20
      %s23 = sphi 0, %s21
      %s24 = sphi 0, %s22
      %s34 = sphi 0, %s36
      %s37 = sphi 0, %s34
      %s38 = sphi 0, %s37
      %s54 = sphi 0, %s38
      %s60 = sphi 0, %s62
      %s63 = sphi 0, %s60
      %s64 = sphi 0, %s63
      %s80 = sphi 0, %s64
      %s86 = sphi 0, %s88
      %s89 = sphi 0, %s86
      %s90 = sphi 0, %s89
      %s106 = sphi 0, %s90
      %s114 = sphi 0, %s116
      %s117 = sphi 0, %s114
      %s118 = sphi 0, %s117
      %s134 = sphi 0, %s118
    $region4: #{_receiver_apply.1} parent=1 // loop_header_branch
      %15 = sbr.rel (%p13) target = $region8
    $region5: #{_receiver_apply.1} parent=1 // loop_body
      %s17 = ssub.s32 %s12, 1
      %s18 = ssub.s32 %s12, 2
      %s25 = sadd.s32 1, %s20
      %p26 = scmp.ge.s32.totalorder %s25, 1
      %s27 = scalar_select %p26, 0, %s25
      %s28 = sadd.s32 1, %s19
      %s29 = scalar_select %p26, %s28, %s19
      %p30 = scmp.ge.s32.totalorder %s29, 3
      %s31 = scalar_select %p30, 0, %s29
      %s32 = ssub.s32 %s19, %s31
      %p33 = scmp.eq.s32.totalorder %s32, 0
      %s35 = sadd.s32 %s34, 1
      %s36 = scalar_select %p33, %s34, %s35
      %p39 = pneg %p33
      %p40 = scmp.eq.s32.totalorder %s12, 2
      %p41 = por %p39, %p40
      %p42 = scmp.ne.s32.totalorder %s34, %s37
      %p43 = scmp.eq.s32.totalorder %s12, 0
      %p44 = por %p42, %p43
      %p45 = scmp.ne.s32.totalorder %s34, %s37
      %p46 = scmp.eq.s32.totalorder %s17, 2
      %p47 = por %p45, %p46
      %p48 = scmp.ne.s32.totalorder %s37, %s38
      %p49 = scmp.eq.s32.totalorder %s17, 0
      %p50 = por %p48, %p49
      %p51 = scmp.ne.s32.totalorder %s37, %s38
      %p52 = scmp.eq.s32.totalorder %s18, 2
      %p53 = por %p51, %p52
      %p55 = scmp.ne.s32.totalorder %s38, %s54
      %p56 = scmp.eq.s32.totalorder %s18, 0
      %p57 = por %p55, %p56
      %s58 = ssub.s32 %s20, %s27
      %p59 = scmp.eq.s32.totalorder %s58, 0
      %s61 = sadd.s32 %s60, 1
      %s62 = scalar_select %p59, %s60, %s61
      %p65 = pneg %p59
      %p66 = scmp.eq.s32.totalorder %s12, 2
      %p67 = por %p65, %p66
      %p68 = scmp.ne.s32.totalorder %s60, %s63
      %p69 = scmp.eq.s32.totalorder %s12, 0
      %p70 = por %p68, %p69
      %p71 = scmp.ne.s32.totalorder %s60, %s63
      %p72 = scmp.eq.s32.totalorder %s17, 2
      %p73 = por %p71, %p72
      %p74 = scmp.ne.s32.totalorder %s63, %s64
      %p75 = scmp.eq.s32.totalorder %s17, 0
      %p76 = por %p74, %p75
      %p77 = scmp.ne.s32.totalorder %s63, %s64
      %p78 = scmp.eq.s32.totalorder %s18, 2
      %p79 = por %p77, %p78
      %p81 = scmp.ne.s32.totalorder %s64, %s80
      %p82 = scmp.eq.s32.totalorder %s18, 0
      %p83 = por %p81, %p82
      %s84 = ssub.s32 %s20, %s27
      %p85 = scmp.eq.s32.totalorder %s84, 0
      %s87 = sadd.s32 %s86, 1
      %s88 = scalar_select %p85, %s86, %s87
      %p91 = pneg %p85
      %p92 = scmp.eq.s32.totalorder %s12, 2
      %p93 = por %p91, %p92
      %p94 = scmp.ne.s32.totalorder %s86, %s89
      %p95 = scmp.eq.s32.totalorder %s12, 0
      %p96 = por %p94, %p95
      %p97 = scmp.ne.s32.totalorder %s86, %s89
      %p98 = scmp.eq.s32.totalorder %s17, 2
      %p99 = por %p97, %p98
      %p100 = scmp.ne.s32.totalorder %s89, %s90
      %p101 = scmp.eq.s32.totalorder %s17, 0
      %p102 = por %p100, %p101
      %p103 = scmp.ne.s32.totalorder %s89, %s90
      %p104 = scmp.eq.s32.totalorder %s18, 2
      %p105 = por %p103, %p104
      %p107 = scmp.ne.s32.totalorder %s90, %s106
      %p108 = scmp.eq.s32.totalorder %s18, 0
      %p109 = por %p107, %p108
      %s110 = ssub.s32 %s19, %s31
      %s111 = ssub.s32 %s20, %s27
      %s112 = sor.u32 %s110, %s111
      %p113 = scmp.eq.s32.totalorder %s112, 0
      %s115 = sadd.s32 %s114, 1
      %s116 = scalar_select %p113, %s114, %s115
      %p119 = pneg %p113
      %p120 = scmp.eq.s32.totalorder %s12, 2
      %p121 = por %p119, %p120
      %p122 = scmp.ne.s32.totalorder %s114, %s117
      %p123 = scmp.eq.s32.totalorder %s12, 0
      %p124 = por %p122, %p123
      %p125 = scmp.ne.s32.totalorder %s114, %s117
      %p126 = scmp.eq.s32.totalorder %s17, 2
      %p127 = por %p125, %p126
      %p128 = scmp.ne.s32.totalorder %s117, %s118
      %p129 = scmp.eq.s32.totalorder %s17, 0
      %p130 = por %p128, %p129
      %p131 = scmp.ne.s32.totalorder %s117, %s118
      %p132 = scmp.eq.s32.totalorder %s18, 2
      %p133 = por %p131, %p132
      %p135 = scmp.ne.s32.totalorder %s118, %s134
      %p136 = scmp.eq.s32.totalorder %s18, 0
      %p137 = por %p135, %p136
      %p138 = scmp.le.s32.totalorder 1, %s12
      %p139 = scmp.lt.s32.totalorder %s12, 4
      %p140 = pnand %p138, %p139
      %p141 = pneg %p140
      // Predicated region
      $region9: #{_receiver_apply.1} parent=5 // pred_check
        _
      $region10: #{_receiver_apply.1} parent=5 // pred_check_branch
        %143 = sbr.rel (%p140) target = $region12
      $region11: #{_receiver_apply.1} parent=5 // pred_region
        %s144 = ssub.s32 %s12, 1
        // Predicated region
        $region13: #{_receiver_apply.1} parent=11 // pred_check
          %p145 = pneg %p76
        $region14: #{_receiver_apply.1} parent=11 // pred_check_branch
          %147 = sbr.rel (%p145) target = $region16
        $region15: #{_receiver_apply.1} parent=11 // pred_region
          %s148 = smul.u32 2, %s22
          %p149 = scmp.lt.s32.totalorder %s148, 1
          %s150 = scalar_select %p149, %s148, 1
          %s151 = smul.addr %s150, 4
          %s152 = scalar_lea.vmem %s1, %s151
          %s153 = smul.u32 2, %s22
        $region16: #{_receiver_apply.1} parent=11 // pred_fallthru
          _
        // Predicated region
        $region17: #{_receiver_apply.1} parent=11 // pred_check
          %p154 = pneg %p102
        $region18: #{_receiver_apply.1} parent=11 // pred_check_branch
          %156 = sbr.rel (%p154) target = $region20
        $region19: #{_receiver_apply.1} parent=11 // pred_region
          %s157 = smul.u32 2, %s22
          %p158 = scmp.lt.s32.totalorder %s157, 1
          %s159 = scalar_select %p158, %s157, 1
          %s160 = scalar_lea.vmem %s2, %s159
          %s161 = smul.u32 2, %s22
        $region20: #{_receiver_apply.1} parent=11 // pred_fallthru
          _
      $region12: #{_receiver_apply.1} parent=5 // pred_fallthru
        _
      %p162 = scmp.lt.s32.totalorder %s12, 3
      // Predicated region
      $region21: #{_receiver_apply.1} parent=5 // pred_check
        %p163 = pneg %p162
      $region22: #{_receiver_apply.1} parent=5 // pred_check_branch
        %165 = sbr.rel (%p163) target = $region24
      $region23: #{_receiver_apply.1} parent=5 // pred_region
        // Predicated region
        $region25: #{_receiver_apply.1} parent=23 // pred_check
          %p166 = pneg %p44
        $region26: #{_receiver_apply.1} parent=23 // pred_check_branch
          %168 = sbr.rel (%p166) target = $region28
        $region27: #{_receiver_apply.1} parent=23 // pred_region
          %s169 = smul.u32 4, %s19
          %p170 = scmp.lt.s32.totalorder %s169, 11
          %s171 = scalar_select %p170, %s169, 11
          %s172 = smul.addr %s171, 2
          %s173 = smul.addr %s172, 4
          %s174 = scalar_lea.vmem %s0, %s173
          %s175 = smul.u32 4, %s19
        $region28: #{_receiver_apply.1} parent=23 // pred_fallthru
          _
      $region24: #{_receiver_apply.1} parent=5 // pred_fallthru
        _
      %p176 = scmp.le.s32.totalorder 1, %s12
      %p177 = scmp.lt.s32.totalorder %s12, 4
      %p178 = pnand %p176, %p177
      %p179 = pneg %p178
      // Predicated region
      $region29: #{_receiver_apply.1} parent=5 // pred_check
        _
      $region30: #{_receiver_apply.1} parent=5 // pred_check_branch
        %181 = sbr.rel (%p178) target = $region32
      $region31: #{_receiver_apply.1} parent=5 // pred_region
        %s182 = ssub.s32 %s12, 1
        %s183 = smul.u32 4, %s21
        %p184 = scmp.lt.s32.totalorder %s183, 11
        %s185 = scalar_select %p184, %s183, 11
        %s186 = smul.addr %s185, 2
        %s187 = smul.addr %s186, 4
        %s188 = scalar_lea.vmem %s0, %s187
        %p189 = pneg %p50
        %p190 = pneg %p47
        %s191 = smul.u32 2, %s22
        %p192 = scmp.lt.s32.totalorder %s191, 1
        %s193 = scalar_select %p192, %s191, 1
        %s194 = smul.addr %s193, 4
        %s195 = scalar_lea.vmem %s1, %s194
        %p196 = pneg %p76
        %p197 = pneg %p73
        %s198 = smul.u32 2, %s22
        %p199 = scmp.lt.s32.totalorder %s198, 1
        %s200 = scalar_select %p199, %s198, 1
        %s201 = scalar_lea.vmem %s2, %s200
        %p202 = pneg %p102
        %p203 = pneg %p99
        %p204 = pneg %p130
        %p205 = pneg %p127
        %s206 = sand.u32 %s117, 1
        %s207 = scalar_lea.sflag [#allocation3], %s206
        %s208 = sand.u32 %s117, 1
        %s209 = smul.addr %s208, 64
        %s210 = scalar_lea.vmem [#allocation2], %s209
        %s211 = smul.u32 4, %s21
        %p212 = scmp.lt.s32.totalorder %s211, 11
        %s213 = scalar_select %p212, %s211, 11
        %s214 = smul.addr %s213, 2
        %s215 = smul.addr %s214, 4
        %s216 = scalar_lea.vmem %s0, %s215
        %s217 = smul.u32 4, %s21
        %s218 = smul.u32 2, %s22
        %p219 = scmp.lt.s32.totalorder %s218, 1
        %s220 = scalar_select %p219, %s218, 1
        %s221 = smul.addr %s220, 4
        %s222 = scalar_lea.vmem %s1, %s221
        %s223 = smul.u32 2, %s22
        %s224 = smul.u32 2, %s22
        %p225 = scmp.lt.s32.totalorder %s224, 1
        %s226 = scalar_select %p225, %s224, 1
        %s227 = scalar_lea.vmem %s2, %s226
        %s228 = smul.u32 2, %s22
        %s229 = smul.u32 4, %s21
        %s230 = smul.u32 2, %s22
        %v231 = vld [vmem:[%s216] sm:$0xff]
        %v232 = vld [vmem:[%s216 + $0x8] sm:$0xff]
        %v233 = vld [vmem:[%s216 + $0x10] sm:$0xff]
        %v234 = vld [vmem:[%s216 + $0x18] sm:$0xff]
        %v235 = vld [vmem:[%s222] sm:$0xff]
        %v236 = vld [vmem:[%s222 + $0x8] sm:$0xff]
        %v237 = vld [vmem:[%s222 + $0x10] sm:$0xff]
        %v238 = vld [vmem:[%s222 + $0x18] sm:$0xff]
        %v239 = vld [vmem:[%s222 + $0x20] sm:$0xff]
        %v240 = vld [vmem:[%s222 + $0x28] sm:$0xff]
        %v241 = vld [vmem:[%s222 + $0x30] sm:$0xff]
        %v242 = vld [vmem:[%s222 + $0x38] sm:$0xff]
        %v243 = vld [vmem:[%s222 + $0x40] sm:$0xff]
        %v244 = vld [vmem:[%s222 + $0x48] sm:$0xff]
        %v245 = vld [vmem:[%s222 + $0x50] sm:$0xff]
        %v246 = vld [vmem:[%s222 + $0x58] sm:$0xff]
        %v247 = vld [vmem:[%s222 + $0x60] sm:$0xff]
        %v248 = vld [vmem:[%s222 + $0x68] sm:$0xff]
        %v249 = vld [vmem:[%s222 + $0x70] sm:$0xff]
        %v250 = vld [vmem:[%s222 + $0x78] sm:$0xff]
        %v251 = vld [vmem:[%s222 + $0x80] sm:$0xff]
        %v252 = vld [vmem:[%s222 + $0x88] sm:$0xff]
        %v253 = vld [vmem:[%s222 + $0x90] sm:$0xff]
        %v254 = vld [vmem:[%s222 + $0x98] sm:$0xff]
        %v255 = vld [vmem:[%s222 + $0xa0] sm:$0xff]
        %v256 = vld [vmem:[%s222 + $0xa8] sm:$0xff]
        %v257 = vld [vmem:[%s222 + $0xb0] sm:$0xff]
        %v258 = vld [vmem:[%s222 + $0xb8] sm:$0xff]
        %v259 = vld [vmem:[%s222 + $0xc0] sm:$0xff]
        %v260 = vld [vmem:[%s222 + $0xc8] sm:$0xff]
        %v261 = vld [vmem:[%s222 + $0xd0] sm:$0xff]
        %v262 = vld [vmem:[%s222 + $0xd8] sm:$0xff]
        %v263 = vld [vmem:[%s222 + $0xe0] sm:$0xff]
        %v264 = vld [vmem:[%s222 + $0xe8] sm:$0xff]
        %v265 = vld [vmem:[%s222 + $0xf0] sm:$0xff]
        %v266 = vld [vmem:[%s222 + $0xf8] sm:$0xff]
        %v267 = vld [vmem:[%s227] sm:$0x3]
        %v269 = vperm.slane %v267, 0
        %v270 = vperm.slane %v267, 1
        %v277 = vunpack.c.l.b16 %v231
        %v278 = vunpack.c.h.b16 %v231
        %v279 = vunpack.c.l.b16 %v232
        %v280 = vunpack.c.h.b16 %v232
        %v281 = vunpack.c.l.b16 %v233
        %v282 = vunpack.c.h.b16 %v233
        %v283 = vunpack.c.l.b16 %v234
        %v284 = vunpack.c.h.b16 %v234
        %v285 = vpack.c.b16 %v279, %v277
        %v286 = vpack.c.b16 %v280, %v278
        %v287 = vpack.c.b16 %v283, %v281
        %v288 = vpack.c.b16 %v284, %v282
        %v325 = vunpack.c.l.b16 %v235
        %v326 = vunpack.c.h.b16 %v235
        %v327 = vunpack.c.l.b16 %v236
        %v328 = vunpack.c.h.b16 %v236
        %v329 = vunpack.c.l.b16 %v237
        %v330 = vunpack.c.h.b16 %v237
        %v331 = vunpack.c.l.b16 %v238
        %v332 = vunpack.c.h.b16 %v238
        %v333 = vunpack.c.l.b16 %v239
        %v334 = vunpack.c.h.b16 %v239
        %v335 = vunpack.c.l.b16 %v240
        %v336 = vunpack.c.h.b16 %v240
        %v337 = vunpack.c.l.b16 %v241
        %v338 = vunpack.c.h.b16 %v241
        %v339 = vunpack.c.l.b16 %v242
        %v340 = vunpack.c.h.b16 %v242
        %v341 = vunpack.c.l.b16 %v243
        %v342 = vunpack.c.h.b16 %v243
        %v343 = vunpack.c.l.b16 %v244
        %v344 = vunpack.c.h.b16 %v244
        %v345 = vunpack.c.l.b16 %v245
        %v346 = vunpack.c.h.b16 %v245
        %v347 = vunpack.c.l.b16 %v246
        %v348 = vunpack.c.h.b16 %v246
        %v349 = vunpack.c.l.b16 %v247
        %v350 = vunpack.c.h.b16 %v247
        %v351 = vunpack.c.l.b16 %v248
        %v352 = vunpack.c.h.b16 %v248
        %v353 = vunpack.c.l.b16 %v249
        %v354 = vunpack.c.h.b16 %v249
        %v355 = vunpack.c.l.b16 %v250
        %v356 = vunpack.c.h.b16 %v250
        %v357 = vunpack.c.l.b16 %v251
        %v358 = vunpack.c.h.b16 %v251
        %v359 = vunpack.c.l.b16 %v252
        %v360 = vunpack.c.h.b16 %v252
        %v361 = vunpack.c.l.b16 %v253
        %v362 = vunpack.c.h.b16 %v253
        %v363 = vunpack.c.l.b16 %v254
        %v364 = vunpack.c.h.b16 %v254
        %v365 = vunpack.c.l.b16 %v255
        %v366 = vunpack.c.h.b16 %v255
        %v367 = vunpack.c.l.b16 %v256
        %v368 = vunpack.c.h.b16 %v256
        %v369 = vunpack.c.l.b16 %v257
        %v370 = vunpack.c.h.b16 %v257
        %v371 = vunpack.c.l.b16 %v258
        %v372 = vunpack.c.h.b16 %v258
        %v373 = vunpack.c.l.b16 %v259
        %v374 = vunpack.c.h.b16 %v259
        %v375 = vunpack.c.l.b16 %v260
        %v376 = vunpack.c.h.b16 %v260
        %v377 = vunpack.c.l.b16 %v261
        %v378 = vunpack.c.h.b16 %v261
        %v379 = vunpack.c.l.b16 %v262
        %v380 = vunpack.c.h.b16 %v262
        %v381 = vunpack.c.l.b16 %v263
        %v382 = vunpack.c.h.b16 %v263
        %v383 = vunpack.c.l.b16 %v264
        %v384 = vunpack.c.h.b16 %v264
        %v385 = vunpack.c.l.b16 %v265
        %v386 = vunpack.c.h.b16 %v265
        %v387 = vunpack.c.l.b16 %v266
        %v388 = vunpack.c.h.b16 %v266
        %v389 = vpack.c.b16 %v327, %v325
        %v390 = vpack.c.b16 %v328, %v326
        %v391 = vpack.c.b16 %v331, %v329
        %v392 = vpack.c.b16 %v332, %v330
        %v393 = vpack.c.b16 %v335, %v333
        %v394 = vpack.c.b16 %v336, %v334
        %v395 = vpack.c.b16 %v339, %v337
        %v396 = vpack.c.b16 %v340, %v338
        %v397 = vpack.c.b16 %v343, %v341
        %v398 = vpack.c.b16 %v344, %v342
        %v399 = vpack.c.b16 %v347, %v345
        %v400 = vpack.c.b16 %v348, %v346
        %v401 = vpack.c.b16 %v351, %v349
        %v402 = vpack.c.b16 %v352, %v350
        %v403 = vpack.c.b16 %v355, %v353
        %v404 = vpack.c.b16 %v356, %v354
        %v405 = vpack.c.b16 %v359, %v357
        %v406 = vpack.c.b16 %v360, %v358
        %v407 = vpack.c.b16 %v363, %v361
        %v408 = vpack.c.b16 %v364, %v362
        %v409 = vpack.c.b16 %v367, %v365
        %v410 = vpack.c.b16 %v368, %v366
        %v411 = vpack.c.b16 %v371, %v369
        %v412 = vpack.c.b16 %v372, %v370
        %v413 = vpack.c.b16 %v375, %v373
        %v414 = vpack.c.b16 %v376, %v374
        %v415 = vpack.c.b16 %v379, %v377
        %v416 = vpack.c.b16 %v380, %v378
        %v417 = vpack.c.b16 %v383, %v381
        %v418 = vpack.c.b16 %v384, %v382
        %v419 = vpack.c.b16 %v387, %v385
        %v420 = vpack.c.b16 %v388, %v386
        %453 = vmatpush.bf16.msra.mxu0 %v403
        %454 = vmatpush.bf16.msra.mxu0 %v401
        %455 = vmatpush.bf16.msra.mxu0 %v399
        %456 = vmatpush.bf16.msra.mxu0 %v397
        %457 = vmatpush.bf16.msra.mxu0 %v395
        %458 = vmatpush.bf16.msra.mxu0 %v393
        %459 = vmatpush.bf16.msra.mxu0 %v391
        %460 = vmatpush.bf16.msra.mxu0 %v389
        %461 = vmatmul.bf16.gmra.mxu0 %v285
        %v462 = vpop.f32.mrf.mxu0
        %v463 = vadd.f32 %v269, %v462
        %v464 = vpop.f32.mrf.mxu0
        %v465 = vadd.f32 %v269, %v464
        %466 = vmatmul.bf16.gmra.mxu0 %v287
        %v467 = vpop.f32.mrf.mxu0
        %v468 = vadd.f32 %v269, %v467
        %v469 = vpop.f32.mrf.mxu0
        %v470 = vadd.f32 %v269, %v469
        %471 = vdwg.mxu0
        %472 = vmatpush.bf16.msra.mxu0 %v419
        %473 = vmatpush.bf16.msra.mxu0 %v417
        %474 = vmatpush.bf16.msra.mxu0 %v415
        %475 = vmatpush.bf16.msra.mxu0 %v413
        %476 = vmatpush.bf16.msra.mxu0 %v411
        %477 = vmatpush.bf16.msra.mxu0 %v409
        %478 = vmatpush.bf16.msra.mxu0 %v407
        %479 = vmatpush.bf16.msra.mxu0 %v405
        %480 = vmatmul.bf16.gmra.mxu0 %v286
        %v481 = vpop.f32.mrf.mxu0
        %v482 = vadd.f32 %v463, %v481
        %v483 = vpop.f32.mrf.mxu0
        %v484 = vadd.f32 %v465, %v483
        %485 = vmatmul.bf16.gmra.mxu0 %v288
        %v486 = vpop.f32.mrf.mxu0
        %v487 = vadd.f32 %v468, %v486
        %v488 = vpop.f32.mrf.mxu0
        %v489 = vadd.f32 %v470, %v488
        %490 = vdwg.mxu0
        %491 = vmatpush.bf16.msra.mxu0 %v404
        %492 = vmatpush.bf16.msra.mxu0 %v402
        %493 = vmatpush.bf16.msra.mxu0 %v400
        %494 = vmatpush.bf16.msra.mxu0 %v398
        %495 = vmatpush.bf16.msra.mxu0 %v396
        %496 = vmatpush.bf16.msra.mxu0 %v394
        %497 = vmatpush.bf16.msra.mxu0 %v392
        %498 = vmatpush.bf16.msra.mxu0 %v390
        %499 = vmatmul.bf16.gmra.mxu0 %v285
        %v500 = vpop.f32.mrf.mxu0
        %v501 = vadd.f32 %v270, %v500
        %v502 = vpop.f32.mrf.mxu0
        %v503 = vadd.f32 %v270, %v502
        %504 = vmatmul.bf16.gmra.mxu0 %v287
        %v505 = vpop.f32.mrf.mxu0
        %v506 = vadd.f32 %v270, %v505
        %v507 = vpop.f32.mrf.mxu0
        %v508 = vadd.f32 %v270, %v507
        %509 = vdwg.mxu0
        %510 = vmatpush.bf16.msra.mxu0 %v420
        %511 = vmatpush.bf16.msra.mxu0 %v418
        %512 = vmatpush.bf16.msra.mxu0 %v416
        %513 = vmatpush.bf16.msra.mxu0 %v414
        %514 = vmatpush.bf16.msra.mxu0 %v412
        %515 = vmatpush.bf16.msra.mxu0 %v410
        %516 = vmatpush.bf16.msra.mxu0 %v408
        %517 = vmatpush.bf16.msra.mxu0 %v406
        %518 = vmatmul.bf16.gmra.mxu0 %v286
        %v519 = vpop.f32.mrf.mxu0
        %v520 = vadd.f32 %v501, %v519
        %v521 = vpop.f32.mrf.mxu0
        %v522 = vadd.f32 %v503, %v521
        %523 = vmatmul.bf16.gmra.mxu0 %v288
        %v524 = vpop.f32.mrf.mxu0
        %v525 = vadd.f32 %v506, %v524
        %v526 = vpop.f32.mrf.mxu0
        %v527 = vadd.f32 %v508, %v526
        %528 = vdwg.mxu0
        %529 = vst [vmem:[%s210] sm:$0xff] %v482
        %530 = vst [vmem:[%s210 + $0x8] sm:$0xff] %v520
        %531 = vst [vmem:[%s210 + $0x10] sm:$0xff] %v484
        %532 = vst [vmem:[%s210 + $0x18] sm:$0xff] %v522
        %533 = vst [vmem:[%s210 + $0x20] sm:$0xff] %v487
        %534 = vst [vmem:[%s210 + $0x28] sm:$0xff] %v525
        %535 = vst [vmem:[%s210 + $0x30] sm:$0xff] %v489
        %536 = vst [vmem:[%s210 + $0x38] sm:$0xff] %v527
        %s537 = sand.u32 %s117, 1
        %s538 = scalar_lea.sflag [#allocation3], %s537
        %s539 = sand.u32 %s117, 1
        %s540 = smul.addr %s539, 64
        %s541 = scalar_lea.vmem [#allocation2], %s540
        // Predicated region
        $region33: #{_receiver_apply.1} parent=31 // pred_check
          %p542 = pneg %p127
        $region34: #{_receiver_apply.1} parent=31 // pred_check_branch
          %544 = sbr.rel (%p542) target = $region36
        $region35: #{_receiver_apply.1} parent=31 // pred_region
          %s545 = smul.u32 4, %s21
          %s546 = smul.u32 2, %s22
          %548 = vsyncadd %s538, 0
          %s549 = smul.addr %s545, 2
          %s550 = sadd.s32 %s546, %s549
          %s551 = smul.addr %s550, 8
          %s552 = scalar_lea.hbm %s3, %s551
          %s553 = sshll.u32 %s541, 4
          %s554 = int_to_ptr.vmem [resolvable:$true] %s553
          %s555 = sshll.u32 %s552, 4
          %s556 = int_to_ptr.hbm [resolvable:$true] %s555
          %561 = dma.vmem_to_hbm [thread:$0]  %s554, 1024, %s556, %s538, 256, 256, 16
        $region36: #{_receiver_apply.1} parent=31 // pred_fallthru
          _
      $region32: #{_receiver_apply.1} parent=5 // pred_fallthru
        _
      %p562 = scmp.le.s32.totalorder 2, %s12
      // Predicated region
      $region37: #{_receiver_apply.1} parent=5 // pred_check
        %p563 = pneg %p562
      $region38: #{_receiver_apply.1} parent=5 // pred_check_branch
        %565 = sbr.rel (%p563) target = $region40
      $region39: #{_receiver_apply.1} parent=5 // pred_region
        %s566 = ssub.s32 %s12, 2
        // Predicated region
        $region41: #{_receiver_apply.1} parent=39 // pred_check
          %p567 = pneg %p133
        $region42: #{_receiver_apply.1} parent=39 // pred_check_branch
          %569 = sbr.rel (%p567) target = $region44
        $region43: #{_receiver_apply.1} parent=39 // pred_region
          %s570 = sand.u32 %s118, 1
          %s571 = scalar_lea.sflag [#allocation3], %s570
          %s572 = sand.u32 %s118, 1
          %s573 = smul.addr %s572, 64
          %s574 = scalar_lea.vmem [#allocation2], %s573
          %576 = dma.done %s571, 1024
        $region44: #{_receiver_apply.1} parent=39 // pred_fallthru
          _
      $region40: #{_receiver_apply.1} parent=5 // pred_fallthru
        _
    $region6: #{_receiver_apply.1} parent=1 // loop_footer
      %s16 = sadd.s32 1, %s12
    $region7: #{_receiver_apply.1} parent=1 // loop_footer_branch
      %11 = sbr.rel target = $region3
    $region8: #{_receiver_apply.1} parent=1 // loop_exit
      _
    %577 = vsyncpa [#allocation3], 1
    %s578 = scalar_lea.sflag [#allocation3], 1
    %579 = vsyncpa %s578, 1

</llo_original>
